<compile_context>
chip_gen: v6e
topology: v6e:2x2x1
jax: 0.10.0
libtpu: 0.0.40
codegen_flags: <defaults>
</compile_context>

<pallas_src>
import jax
import jax.numpy as jnp
from jax.experimental import pallas as pl
from jax.experimental.pallas import tpu as pltpu

FP8_E4M3_MAX = 448.0               # saturation bound of float8_e4m3fn

_WIDE_LANE = 1024                  # preferred lane-dense width
_NARROW_LANE = 128                 # minimum lane width
_TARGET_BLOCK_BYTES = 4 * 1024 * 1024   # per input tile (single buffer)
_ROW_ALIGN = 32                    # fp8 packs 4/sublane -> keep rows % 32 == 0


def _qdq_kernel(scales_ref, x_ref, o_ref):
    """Elementwise quantize->dequantize on one (block_rows, lane) tile."""
    s_inv = scales_ref[0]                        # f32 scalars in SMEM
    s = scales_ref[1]

    # quantize: single upcast to f32, scale, saturate, cast down to fp8.
    # (f32 math: no bf16 extend/truncate pairs on v5e, one rounding only.)
    x = x_ref[...].astype(jnp.float32)
    xs = jnp.clip(x * s_inv, -FP8_E4M3_MAX, FP8_E4M3_MAX)   # +-inf saturate to +-448
    q = xs.astype(jnp.float8_e4m3fn)

    # dequantize: cast back up and rescale (fp8 values are exact in f32)
    o_ref[...] = (q.astype(jnp.float32) * s).astype(o_ref.dtype)


def _choose_layout(n):
    """Pick a lane width (multiple of 128) dividing n; prefer >= 16 rows so the
    row axis can split into >= 2 blocks (both TensorCores on v7x)."""
    for cand in (_WIDE_LANE, 512, 256, _NARROW_LANE):
        if n % cand == 0 and n // cand >= 16:
            return cand, 0
    for cand in (_WIDE_LANE, 512, 256, _NARROW_LANE):
        if n % cand == 0:
            return cand, 0
    # unaligned element count: fall back to a padded narrow-lane view
    return _NARROW_LANE, (-n) % _NARROW_LANE


def quant_dequant(x, scale_inv, scale=None, hp_dtype=jnp.bfloat16,
                  donate_input=False):
    """Pallas QuantDequant: x (any shape, e.g. NCHW) -> hp_dtype, same shape."""
    orig_shape = x.shape
    n = x.size
    hp_dtype = jnp.dtype(hp_dtype)

    flat = x.reshape(-1)
    lane, pad = _choose_layout(n)
    if pad:
        # TODO(synk): unaligned n costs one extra pad and one slice HBM pass;
        # a masked-tail kernel (true length in SMEM + masked last-block store)
        # would remove them.  NN tensors are virtually always 128-aligned.
        flat = jnp.pad(flat, (0, pad))
    m = flat.shape[0] // lane
    x2d = flat.reshape(m, lane)

    in_itemsize = x2d.dtype.itemsize
    out_itemsize = hp_dtype.itemsize

    # Block rows: ~4 MiB input tiles, rounded to a multiple of 32; if the whole
    # array fits in one block, still split into >= 2 blocks (multiple of 8 rows)
    # so the parallel grid axis shards across both v7x TensorCores.
    block_elems = max(lane, _TARGET_BLOCK_BYTES // in_itemsize)
    br_cap = max(_ROW_ALIGN, (block_elems // lane) // _ROW_ALIGN * _ROW_ALIGN)
    if m <= br_cap:
        half = -(-m // 2)
        br = ((half + 7) // 8) * 8
        if br >= m:
            br = m                       # tiny tensor: single full-height block
    else:
        br = br_cap
    grid = pl.cdiv(m, br)                # ragged last block is masked by Pallas

    # Both scales packed into one tiny SMEM array (8 bytes).
    s_inv32 = jnp.asarray(scale_inv, jnp.float32).reshape(())
    s32 = (1.0 / s_inv32) if scale is None else jnp.asarray(scale, jnp.float32).reshape(())
    scales = jnp.stack([s_inv32, s32])

    # VMEM: double-buffered input + output tiles, plus slack.
    in_tile = br * lane * in_itemsize
    out_tile = br * lane * out_itemsize
    vmem_limit = max(16 << 20, 2 * (in_tile + out_tile) + (2 << 20))

    cost = pl.CostEstimate(flops=3 * n, transcendentals=0,
                           bytes_accessed=n * (in_itemsize + out_itemsize))

    io_aliases = {}
    if donate_input and pad == 0 and x2d.dtype == hp_dtype:
        io_aliases = {1: 0}              # reuse x's HBM buffer for the output

    out2d = pl.pallas_call(
        _qdq_kernel,
        out_shape=jax.ShapeDtypeStruct((m, lane), hp_dtype),
        grid_spec=pltpu.PrefetchScalarGridSpec(
            num_scalar_prefetch=0,
            grid=(grid,),
            in_specs=[
                pl.BlockSpec(memory_space=pltpu.MemorySpace.SMEM),   # scales
                pl.BlockSpec((br, lane), lambda i: (i, 0)),          # x tile
            ],
            out_specs=pl.BlockSpec((br, lane), lambda i: (i, 0)),
        ),
        compiler_params=pltpu.CompilerParams(
            dimension_semantics=("parallel",),   # shards rows across v7x's 2 TCs
            vmem_limit_bytes=vmem_limit),
        cost_estimate=cost,
        input_output_aliases=io_aliases,
    )(scales, x2d)

    if pad:
        return out2d.reshape(-1)[:n].reshape(orig_shape)
    return out2d.reshape(orig_shape)


def _reference(x, scale_inv, scale=None, hp_dtype=jnp.bfloat16):
    """Pure-JAX reference mirroring the op (f32 math, saturating fp8 cast)."""
    s_inv = jnp.asarray(scale_inv, jnp.float32)
    s = (1.0 / s_inv) if scale is None else jnp.asarray(scale, jnp.float32)
    xs = jnp.clip(x.astype(jnp.float32) * s_inv, -FP8_E4M3_MAX, FP8_E4M3_MAX)
    q = xs.astype(jnp.float8_e4m3fn)
    return (q.astype(jnp.float32) * s).astype(hp_dtype)


if __name__ == "__main__":
    key = jax.random.PRNGKey(0)
    # NCHW input, as a PyTorch conv activation would be.
    x = jax.random.normal(key, (2, 4, 16, 16), dtype=jnp.bfloat16) * 3.0
    scale_inv = 0.25          # deterministic calibrated scale (=> scale = 4.0)

    z = quant_dequant(x, scale_inv, hp_dtype=jnp.bfloat16)
    jax.block_until_ready(z)

    z_ref = _reference(x, scale_inv, hp_dtype=jnp.bfloat16)
    assert z.shape == x.shape and z.dtype == jnp.bfloat16
    assert jnp.allclose(z.astype(jnp.float32), z_ref.astype(jnp.float32),
                        atol=1e-2, rtol=1e-2)

    # Small unaligned-size sanity check (exercises the padded fallback path).
    x2 = jax.random.normal(jax.random.PRNGKey(1), (3, 5, 7), dtype=jnp.float32)
    z2 = quant_dequant(x2, 0.5, hp_dtype=jnp.float32)
    jax.block_until_ready(z2)
    z2_ref = _reference(x2, 0.5, hp_dtype=jnp.float32)
    assert z2.shape == x2.shape
    assert jnp.allclose(z2, z2_ref, atol=1e-3, rtol=1e-3)

    # TODO(synk): cur_accelerator.synchronize() between quant and dequant has no
    # Pallas equivalent (and is unnecessary): both halves are fused in one kernel.

    print("KERNEL_OK")
</pallas_src>

<mosaic_0001>
module attributes {stable_mosaic.version = 11 : i64} {
  func.func @_qdq_kernel(%arg0: i32, %arg1: memref<2xf32, #tpu.memory_space<smem>>, %arg2: memref<8x128xbf16, #tpu.memory_space<vmem>>, %arg3: memref<8x128xbf16, #tpu.memory_space<vmem>>) attributes {dimension_semantics = [#tpu.dimension_semantics<parallel>], iteration_bounds = array<i64: 2>, scalar_prefetch = 0 : i64, scratch_operands = 0 : i64, tpu.core_type = #tpu.core_type<tc>, window_params = [{transform_indices = @transform_0, window_bounds = array<i64: 2>}, {transform_indices = @transform_1, window_bounds = array<i64: 8, 128>}, {transform_indices = @transform_2, window_bounds = array<i64: 8, 128>}]} {
    %c0 = arith.constant 0 : index
    %0 = memref.load %arg1[%c0] : memref<2xf32, #tpu.memory_space<smem>>
    %c1 = arith.constant 1 : index
    %1 = memref.load %arg1[%c1] : memref<2xf32, #tpu.memory_space<smem>>
    %c0_0 = arith.constant 0 : index
    %c0_1 = arith.constant 0 : index
    %2 = vector.load %arg2[%c0_0, %c0_1] : memref<8x128xbf16, #tpu.memory_space<vmem>>, vector<8x128xbf16>
    %3 = arith.extf %2 : vector<8x128xbf16> to vector<8x128xf32>
    %4 = vector.broadcast %0 : f32 to vector<8x128xf32>
    %5 = arith.mulf %3, %4 : vector<8x128xf32>
    %cst = arith.constant -4.480000e+02 : f32
    %cst_2 = arith.constant 4.480000e+02 : f32
    %6 = vector.broadcast %cst : f32 to vector<8x128xf32>
    %7 = arith.maximumf %6, %5 : vector<8x128xf32>
    %8 = vector.broadcast %cst_2 : f32 to vector<8x128xf32>
    %9 = arith.minimumf %8, %7 : vector<8x128xf32>
    %10 = arith.truncf %9 : vector<8x128xf32> to vector<8x128xf8E4M3FN>
    %11 = arith.extf %10 : vector<8x128xf8E4M3FN> to vector<8x128xf32>
    %12 = vector.broadcast %1 : f32 to vector<8x128xf32>
    %13 = arith.mulf %11, %12 : vector<8x128xf32>
    %14 = arith.truncf %13 : vector<8x128xf32> to vector<8x128xbf16>
    %c0_3 = arith.constant 0 : index
    %c0_4 = arith.constant 0 : index
    %15 = vector.load %arg3[%c0_3, %c0_4] : memref<8x128xbf16, #tpu.memory_space<vmem>>, vector<8x128xbf16>
    tpu.vector_store %arg3[%c0_3, %c0_4], %14 {strides = array<i32>} : memref<8x128xbf16, #tpu.memory_space<vmem>>, vector<8x128xbf16>,
    return
  }
  func.func @transform_0(%arg0: i32) -> i32 {
    %c0_i32 = arith.constant 0 : i32
    %c0_i32_0 = arith.constant 0 : i32
    return %c0_i32 : i32
  }
  func.func @transform_1(%arg0: i32) -> (i32, i32) {
    %c0_i32 = arith.constant 0 : i32
    %c0_i32_0 = arith.constant 0 : i32
    return %arg0, %c0_i32 : i32, i32
  }
  func.func @transform_2(%arg0: i32) -> (i32, i32) {
    %c0_i32 = arith.constant 0 : i32
    %c0_i32_0 = arith.constant 0 : i32
    return %arg0, %c0_i32 : i32, i32
  }
}

</mosaic_0001>

<llo_original>
// kernel: tpu_custom_call.1
$region0: #{tpu_custom_call.1}
  #allocation0 [shape = 'u32[]', space=smem, size = 0x4, offset = 0x4, fixed_abs, tag = 'smem constant byte address 0x4 - core index']
  #allocation1 [shape = 'u32[144,128]{1,0:T(1,128)}', space=vmem, size = 0x12000, scoped, tag = 'internal scratch']
  %s0 = inlined_call_operand.hbm [shape: f32[2], index: 0, kind: input, shape index: {}]
  %s1 = inlined_call_operand.hbm [shape: bf16[16,128], index: 1, kind: input, shape index: {}]
  %s2 = inlined_call_operand.hbm [shape: bf16[16,128], index: 2, kind: output, shape index: {}]
  %s3 = sld [smem:[#allocation0]]
  $region50: #{tpu_custom_call.1} parent=0
    _
  %s5 = ssub.s32 1, %s3
  %s6 = scalar_select 0, %s5, %s3
  $region1: #{tpu_custom_call.1} parent=0
    #allocation2 [shape = 'u8[512]{0}', space=smem, size = 0x200, scoped, tag = 'input window, operand 0, single buffered']
    #allocation3 [shape = 's32[2]{0}', space=sflag, size = 0x8, scoped, tag = 'scoped memory for tpu_custom_call.1']
    #allocation4 [shape = 's32[2]{0}', space=sflag, size = 0x8, scoped, tag = 'scoped memory for tpu_custom_call.1']
    #allocation5 [shape = 's32[2]{0}', space=sflag, size = 0x8, scoped, tag = 'scoped memory for tpu_custom_call.1']
    #allocation6 [shape = 'u8[4096]{0}', space=vmem, size = 0x1000, scoped, tag = 'input window, operand 1']
    #allocation7 [shape = 'u8[4096]{0}', space=vmem, size = 0x1000, scoped, tag = 'output window, operand 0']
    %7 = vsyncpa [#allocation5], 0
    %8 = vsyncpa [#allocation3], 0
    %s9 = scalar_lea.sflag [#allocation3], 1
    %10 = vsyncpa %s9, 0
    %11 = vsyncpa [#allocation4], 0
    %s12 = scalar_lea.sflag [#allocation4], 1
    %13 = vsyncpa %s12, 0
    loop: start=0, step=1, limit=4
    $region2: #{tpu_custom_call.1} parent=1 // loop_pre_header
      _
    $region3: #{tpu_custom_call.1} parent=1 // loop_header
      %s15 = sphi 0, %s19
      %p16 = scmp.ge.s32.totalorder %s15, 4
      %s23 = sphi 0, %s23
      %s25 = sphi 0, %s23
      %s26 = sphi 0, %s25
      %s40 = sphi 0, %s26
      %s46 = sphi 0, %s48
      %s49 = sphi 0, %s46
      %s50 = sphi 0, %s49
      %s66 = sphi 0, %s50
      %s72 = sphi 0, %s74
      %s75 = sphi 0, %s72
      %s76 = sphi 0, %s75
      %s92 = sphi 0, %s76
    $region4: #{tpu_custom_call.1} parent=1 // loop_header_branch
      %18 = sbr.rel (%p16) target = $region8
    $region5: #{tpu_custom_call.1} parent=1 // loop_body
      %s20 = ssub.s32 %s15, 1
      %s21 = ssub.s32 %s15, 2
      %s22 = sadd.s32 %s15, 1
      %s24 = sadd.s32 %s23, 1
      %p27 = scmp.eq.s32.totalorder %s15, 1
      %p28 = scmp.ne.s32.totalorder %s23, %s25
      %p29 = scmp.eq.s32.totalorder %s15, 0
      %p30 = por %p28, %p29
      %p31 = scmp.ne.s32.totalorder %s23, %s25
      %p32 = scmp.eq.s32.totalorder %s20, 1
      %p33 = por %p31, %p32
      %p34 = scmp.ne.s32.totalorder %s25, %s26
      %p35 = scmp.eq.s32.totalorder %s20, 0
      %p36 = por %p34, %p35
      %p37 = scmp.ne.s32.totalorder %s25, %s26
      %p38 = scmp.eq.s32.totalorder %s21, 1
      %p39 = por %p37, %p38
      %p41 = scmp.ne.s32.totalorder %s26, %s40
      %p42 = scmp.eq.s32.totalorder %s21, 0
      %p43 = por %p41, %p42
      %s44 = ssub.s32 %s15, %s22
      %p45 = scmp.eq.s32.totalorder %s44, 0
      %s47 = sadd.s32 %s46, 1
      %s48 = scalar_select %p45, %s46, %s47
      %p51 = pneg %p45
      %p52 = scmp.eq.s32.totalorder %s15, 1
      %p53 = por %p51, %p52
      %p54 = scmp.ne.s32.totalorder %s46, %s49
      %p55 = scmp.eq.s32.totalorder %s15, 0
      %p56 = por %p54, %p55
      %p57 = scmp.ne.s32.totalorder %s46, %s49
      %p58 = scmp.eq.s32.totalorder %s20, 1
      %p59 = por %p57, %p58
      %p60 = scmp.ne.s32.totalorder %s49, %s50
      %p61 = scmp.eq.s32.totalorder %s20, 0
      %p62 = por %p60, %p61
      %p63 = scmp.ne.s32.totalorder %s49, %s50
      %p64 = scmp.eq.s32.totalorder %s21, 1
      %p65 = por %p63, %p64
      %p67 = scmp.ne.s32.totalorder %s50, %s66
      %p68 = scmp.eq.s32.totalorder %s21, 0
      %p69 = por %p67, %p68
      %s70 = ssub.s32 %s15, %s22
      %p71 = scmp.eq.s32.totalorder %s70, 0
      %s73 = sadd.s32 %s72, 1
      %s74 = scalar_select %p71, %s72, %s73
      %p77 = pneg %p71
      %p78 = scmp.eq.s32.totalorder %s15, 1
      %p79 = por %p77, %p78
      %p80 = scmp.ne.s32.totalorder %s72, %s75
      %p81 = scmp.eq.s32.totalorder %s15, 0
      %p82 = por %p80, %p81
      %p83 = scmp.ne.s32.totalorder %s72, %s75
      %p84 = scmp.eq.s32.totalorder %s20, 1
      %p85 = por %p83, %p84
      %p86 = scmp.ne.s32.totalorder %s75, %s76
      %p87 = scmp.eq.s32.totalorder %s20, 0
      %p88 = por %p86, %p87
      %p89 = scmp.ne.s32.totalorder %s75, %s76
      %p90 = scmp.eq.s32.totalorder %s21, 1
      %p91 = por %p89, %p90
      %p93 = scmp.ne.s32.totalorder %s76, %s92
      %p94 = scmp.eq.s32.totalorder %s21, 0
      %p95 = por %p93, %p94
      %p96 = scmp.le.s32.totalorder 1, %s15
      %p97 = scmp.lt.s32.totalorder %s15, 3
      %p98 = pnand %p96, %p97
      %p99 = pneg %p98
      // Predicated region
      $region9: #{tpu_custom_call.1} parent=5 // pred_check
        _
      $region10: #{tpu_custom_call.1} parent=5 // pred_check_branch
        %101 = sbr.rel (%p98) target = $region12
      $region11: #{tpu_custom_call.1} parent=5 // pred_region
        %s102 = ssub.s32 %s15, 1
        // Predicated region
        $region13: #{tpu_custom_call.1} parent=11 // pred_check
          %p103 = pneg %p36
        $region14: #{tpu_custom_call.1} parent=11 // pred_check_branch
          %105 = sbr.rel (%p103) target = $region16
        $region15: #{tpu_custom_call.1} parent=11 // pred_region
          %s107 = ssub.s32 16, 16
          %108 = vsyncadd [#allocation5], %s107
          %111 = dma.hbm_to_smem %s0, 16, [#allocation2], [#allocation5]
        $region16: #{tpu_custom_call.1} parent=11 // pred_fallthru
          _
      $region12: #{tpu_custom_call.1} parent=5 // pred_fallthru
        _
      %p112 = scmp.lt.s32.totalorder %s15, 2
      // Predicated region
      $region17: #{tpu_custom_call.1} parent=5 // pred_check
        %p113 = pneg %p112
      $region18: #{tpu_custom_call.1} parent=5 // pred_check_branch
        %115 = sbr.rel (%p113) target = $region20
      $region19: #{tpu_custom_call.1} parent=5 // pred_region
        // Predicated region
        $region21: #{tpu_custom_call.1} parent=19 // pred_check
          %p116 = pneg %p56
        $region22: #{tpu_custom_call.1} parent=19 // pred_check_branch
          %118 = sbr.rel (%p116) target = $region24
        $region23: #{tpu_custom_call.1} parent=19 // pred_region
          %s119 = sand.u32 %s46, 1
          %s120 = scalar_lea.sflag [#allocation3], %s119
          %s121 = sand.u32 %s46, 1
          %s122 = smul.addr %s121, 4
          %s123 = scalar_lea.vmem [#allocation6], %s122
          %s125 = ssub.s32 64, 64
          %126 = vsyncadd %s120, %s125
          %s127 = smul.addr %s15, 64
          %s128 = scalar_lea.hbm %s1, %s127
          %s130 = sshll.u32 %s123, 4
          %s131 = int_to_ptr.vmem [resolvable:$true] %s130
          %133 = dma.hbm_to_vmem [thread:$0]  %s128, 64, %s131, %s120
        $region24: #{tpu_custom_call.1} parent=19 // pred_fallthru
          _
      $region20: #{tpu_custom_call.1} parent=5 // pred_fallthru
        _
      %p134 = scmp.le.s32.totalorder 1, %s15
      %p135 = scmp.lt.s32.totalorder %s15, 3
      %p136 = pnand %p134, %p135
      %p137 = pneg %p136
      // Predicated region
      $region25: #{tpu_custom_call.1} parent=5 // pred_check
        _
      $region26: #{tpu_custom_call.1} parent=5 // pred_check_branch
        %139 = sbr.rel (%p136) target = $region28
      $region27: #{tpu_custom_call.1} parent=5 // pred_region
        %s140 = ssub.s32 %s15, 1
        // Predicated region
        $region29: #{tpu_custom_call.1} parent=27 // pred_check
          %p141 = pneg %p36
        $region30: #{tpu_custom_call.1} parent=27 // pred_check_branch
          %143 = sbr.rel (%p141) target = $region32
        $region31: #{tpu_custom_call.1} parent=27 // pred_region
          %144 = dma.done [#allocation5], 16
        $region32: #{tpu_custom_call.1} parent=27 // pred_fallthru
          _
        %s145 = sand.u32 %s49, 1
        %s146 = scalar_lea.sflag [#allocation3], %s145
        %s147 = sand.u32 %s49, 1
        %s148 = smul.addr %s147, 4
        %s149 = scalar_lea.vmem [#allocation6], %s148
        // Predicated region
        $region33: #{tpu_custom_call.1} parent=27 // pred_check
          %p150 = pneg %p62
        $region34: #{tpu_custom_call.1} parent=27 // pred_check_branch
          %152 = sbr.rel (%p150) target = $region36
        $region35: #{tpu_custom_call.1} parent=27 // pred_region
          %153 = dma.done %s146, 64
        $region36: #{tpu_custom_call.1} parent=27 // pred_fallthru
          _
        %154 = sfence
        %p155 = pneg %p36
        %p156 = pneg %p33
        %s157 = sand.u32 %s49, 1
        %s158 = scalar_lea.sflag [#allocation3], %s157
        %s159 = sand.u32 %s49, 1
        %s160 = smul.addr %s159, 4
        %s161 = scalar_lea.vmem [#allocation6], %s160
        %p162 = pneg %p62
        %p163 = pneg %p59
        %p164 = pneg %p88
        %p165 = pneg %p85
        %s166 = sand.u32 %s75, 1
        %s167 = scalar_lea.sflag [#allocation4], %s166
        %s168 = sand.u32 %s75, 1
        %s169 = smul.addr %s168, 4
        %s170 = scalar_lea.vmem [#allocation7], %s169
        %s171 = sld [smem:[#allocation2]]
        %s172 = sld [smem:[#allocation2 + $0x1]]
        %v173 = vld [vmem:[%s149] sm:$0xf]
        %v174 = vunpack.c.l.bf16 %v173
        %v175 = vstv %s171
        %v176 = vmul.f32 %v174, %v175
        %v177 = vmax.f32 %v176, -448.0
        %v178 = vmin.f32 %v177, 448.0
        %v179 = vand.u32 2147483647, %v178
        %v180 = vand.u32 %v178, 2147483648
        %v182 = vadd.f32 1182793728, %v179
        %v184 = vsub.s32 %v182, 1182793728
        %v185 = vshrl.u32 %v178, 20
        %v186 = vand.u32 %v185, 1
        %v187 = vadd.s32 %v179, 3288858623
        %v188 = vadd.s32 %v187, %v186
        %v189 = vshrl.u32 %v188, 20
        %vm190 = vcmp.lt.s32.totalorder %v179, 1015021568
        %v191 = vsel %vm190, %v184, %v189
        %vm192 = vcmp.ge.s32.totalorder %v179, 1139277825
        %v193 = vsel %vm192, 127, %v191
        %vm194 = vcmp.ne.f32.partialorder %v178, %v178
        %v195 = vsel %vm194, 127, %v193
        %v196 = vshrl.u32 %v180, 24
        %v197 = vor.u32 %v195, %v196
        %v198 = vor.u32 %v197, 4294967040
        %v200 = vpack.c.b16 %v198, %v198
        %v201 = vpack.c.b8 %v200, %v200
        $region37: #{tpu_custom_call.1} parent=27
          #allocation8 [shape = 'u8[4096]{0}', space=vmem, size = 0x1000, scoped, tag = 'scoped memory for tpu_custom_call.1']
          %203 = vst [vmem:[#allocation8] sm:$0xff] %v201
          %v204 = vld [vmem:[#allocation8] sm:$0x3]
          %v205 = vunpack.c.0.f8e4m3b11 %v204
          %v206 = vunpack.c.1.f8e4m3b11 %v204
          %v207 = vunpack.c.2.f8e4m3b11 %v204
          %v208 = vunpack.c.3.f8e4m3b11 %v204
          %v209 = vand.u32 2147483647, %v205
          %vm210 = vcmp.gt.f32.partialorder %v209, 29.0
          %vm211 = vcmp.ne.f32.partialorder %v205, %v205
          %v212 = vmul.f32 %v205, 16.0
          %v213 = vsel %vm211, -0.0, %v212
          %v214 = vsel %vm210, nan, %v213
          %v215 = vand.u32 2147483647, %v206
          %vm216 = vcmp.gt.f32.partialorder %v215, 29.0
          %vm217 = vcmp.ne.f32.partialorder %v206, %v206
          %v218 = vmul.f32 %v206, 16.0
          %v219 = vsel %vm217, -0.0, %v218
          %v220 = vsel %vm216, nan, %v219
          %v221 = vand.u32 2147483647, %v207
          %vm222 = vcmp.gt.f32.partialorder %v221, 29.0
          %vm223 = vcmp.ne.f32.partialorder %v207, %v207
          %v224 = vmul.f32 %v207, 16.0
          %v225 = vsel %vm223, -0.0, %v224
          %v226 = vsel %vm222, nan, %v225
          %v227 = vand.u32 2147483647, %v208
          %vm228 = vcmp.gt.f32.partialorder %v227, 29.0
          %vm229 = vcmp.ne.f32.partialorder %v208, %v208
          %v230 = vmul.f32 %v208, 16.0
          %v231 = vsel %vm229, -0.0, %v230
          %v232 = vsel %vm228, nan, %v231
        %v233 = vstv %s172
        %v234 = vmul.f32 %v214, %v233
        %v235 = vpack.c.bf16 %v234, %v234
        %236 = vst [vmem:[%s170] sm:$0xf] %v235
        %s237 = sand.u32 %s75, 1
        %s238 = scalar_lea.sflag [#allocation4], %s237
        %s239 = sand.u32 %s75, 1
        %s240 = smul.addr %s239, 4
        %s241 = scalar_lea.vmem [#allocation7], %s240
        // Predicated region
        $region38: #{tpu_custom_call.1} parent=27 // pred_check
          %p242 = pneg %p85
        $region39: #{tpu_custom_call.1} parent=27 // pred_check_branch
          %244 = sbr.rel (%p242) target = $region41
        $region40: #{tpu_custom_call.1} parent=27 // pred_region
          %s246 = ssub.s32 64, 64
          %247 = vsyncadd %s238, %s246
          %s248 = smul.addr %s20, 64
          %s249 = scalar_lea.hbm %s2, %s248
          %s251 = sshll.u32 %s241, 4
          %s252 = int_to_ptr.vmem [resolvable:$true] %s251
          %254 = dma.vmem_to_hbm [thread:$0]  %s252, 64, %s249, %s238
        $region41: #{tpu_custom_call.1} parent=27 // pred_fallthru
          _
      $region28: #{tpu_custom_call.1} parent=5 // pred_fallthru
        _
      %p255 = scmp.le.s32.totalorder 2, %s15
      // Predicated region
      $region42: #{tpu_custom_call.1} parent=5 // pred_check
        %p256 = pneg %p255
      $region43: #{tpu_custom_call.1} parent=5 // pred_check_branch
        %258 = sbr.rel (%p256) target = $region45
      $region44: #{tpu_custom_call.1} parent=5 // pred_region
        %s259 = ssub.s32 %s15, 2
        // Predicated region
        $region46: #{tpu_custom_call.1} parent=44 // pred_check
          %p260 = pneg %p91
        $region47: #{tpu_custom_call.1} parent=44 // pred_check_branch
          %262 = sbr.rel (%p260) target = $region49
        $region48: #{tpu_custom_call.1} parent=44 // pred_region
          %s263 = sand.u32 %s76, 1
          %s264 = scalar_lea.sflag [#allocation4], %s263
          %s265 = sand.u32 %s76, 1
          %s266 = smul.addr %s265, 4
          %s267 = scalar_lea.vmem [#allocation7], %s266
          %268 = dma.done %s264, 64
        $region49: #{tpu_custom_call.1} parent=44 // pred_fallthru
          _
      $region45: #{tpu_custom_call.1} parent=5 // pred_fallthru
        _
    $region6: #{tpu_custom_call.1} parent=1 // loop_footer
      %s19 = sadd.s32 1, %s15
    $region7: #{tpu_custom_call.1} parent=1 // loop_footer_branch
      %14 = sbr.rel target = $region3
    $region8: #{tpu_custom_call.1} parent=1 // loop_exit
      _
    %269 = vsyncpa [#allocation3], 1
    %s270 = scalar_lea.sflag [#allocation3], 1
    %271 = vsyncpa %s270, 1
    %272 = vsyncpa [#allocation4], 1
    %s273 = scalar_lea.sflag [#allocation4], 1
    %274 = vsyncpa %s273, 1
    %275 = vsyncpa [#allocation5], 1
    %s276 = scalar_lea.sflag [#allocation5], 1
    %277 = vsyncpa %s276, 1

</llo_original>
